<compile_context>
chip_gen: v7x
topology: tpu7x:2x2x1
jax: 0.10.0
libtpu: 0.0.40
codegen_flags: <defaults>
</compile_context>

<pallas_src>
import functools
import math

import jax
import jax.numpy as jnp
from jax.experimental import pallas as pl
from jax.experimental.pallas import tpu as pltpu


def _round_up(x, m):
    return ((x + m - 1) // m) * m


def _pad_to(x, target_shape):
    pads = [(0, t - s) for s, t in zip(x.shape, target_shape)]
    if all(p == (0, 0) for p in pads):
        return x
    return jnp.pad(x, pads)


def _pick_batch_tile(B, per_batch_bytes, budget_bytes=4 * 1024 * 1024):
    """Largest divisor of B whose working set fits the budget, preferring to
    keep >= 2 grid steps so v7x's second TensorCore is not idle."""
    divisors = [d for d in range(1, B + 1) if B % d == 0]
    fitting = [d for d in divisors if d * per_batch_bytes <= budget_bytes] or [1]
    multi_step = [d for d in fitting if B // d >= 2]
    return max(multi_step) if multi_step else max(fitting)


def _attention_kernel(q_ref, k_ref, v_ref, mask_ref, o_ref, *, scale):
    """One batch tile per grid step.

    q_ref: (Bt, Qp, Dp)  k_ref: (Bt, Kp, Dp)  v_ref: (Bt, Kp, Dvp)
    mask_ref: (Bt, 1, Kp) int32 (1 = valid key, 0 = masked)
    o_ref: (Bt, Qp, Dvp)
    """
    q = q_ref[...]          # native dtype -> MXU operand
    k = k_ref[...]
    v = v_ref[...]

    # scores = Q @ K^T / sqrt(d): contract on D of both operands -> no XLU
    # transpose; f32 accumulation on the MXU.
    scores = jnp.einsum(
        "bqd,bkd->bqk", q, k, preferred_element_type=jnp.float32
    ) * scale                                               # (Bt, Qp, Kp) f32

    # masked_softmax: invalid (and padded) key positions get -1e6 before softmax.
    scores = jnp.where(mask_ref[...] != 0, scores, jnp.float32(-1000000.0))

    # numerically-stable softmax along K (VPU + EUP), all f32.
    m = jnp.max(scores, axis=-1, keepdims=True)
    e = jnp.exp(scores - m)
    s = jnp.sum(e, axis=-1, keepdims=True)
    weights = e * pl.reciprocal(s, approx=True)             # EUP vrcp

    # output = weights @ V, operands in V's dtype, f32 accumulation.
    out = jnp.einsum(
        "bqk,bkv->bqv", weights.astype(v.dtype), v,
        preferred_element_type=jnp.float32,
    )                                                       # (Bt, Qp, Dvp)
    o_ref[...] = out.astype(o_ref.dtype)


def dot_product_attention(queries, keys, values, valid_lens=None):
    """queries (B,Q,D), keys (B,K,D), values (B,K,Dv), valid_lens (B,) or None."""
    B, Q, D = queries.shape
    K = keys.shape[1]
    Dv = values.shape[-1]
    scale = 1.0 / math.sqrt(D)

    # Pad to lane/sublane-friendly sizes (lane-dense loads, stores and scores).
    Qp = _round_up(Q, 8)
    Kp = _round_up(K, 128)
    Dp = _round_up(D, 128)
    Dvp = _round_up(Dv, 128)

    qp = _pad_to(queries, (B, Qp, Dp))
    kp = _pad_to(keys, (B, Kp, Dp))
    vp = _pad_to(values, (B, Kp, Dvp))

    if valid_lens is None:
        vl = jnp.full((B,), K, dtype=jnp.int32)
    else:
        vl = valid_lens.astype(jnp.int32)
    # Precomputed key-validity mask (also masks the padded K columns).
    key_mask = (
        jnp.arange(Kp, dtype=jnp.int32)[None, :] < vl[:, None]
    ).astype(jnp.int32)[:, None, :]                         # (B, 1, Kp)

    itemsize = jnp.dtype(queries.dtype).itemsize
    per_batch_bytes = (
        (Qp * Dp + Kp * Dp + Kp * Dvp + Qp * Dvp) * itemsize
        + Kp * 4                       # mask
        + 3 * Qp * Kp * 4              # f32 scores / exp / weights intermediates
    )
    Bt = _pick_batch_tile(B, per_batch_bytes)
    grid = (B // Bt,)

    kernel = functools.partial(_attention_kernel, scale=scale)

    cost = pl.CostEstimate(
        flops=int(2 * B * Q * K * (D + Dv)),
        transcendentals=int(B * Q * K),
        bytes_accessed=int(
            (queries.size + keys.size + values.size + B * Q * Dv) * itemsize
            + key_mask.size * 4
        ),
    )

    out_padded = pl.pallas_call(
        kernel,
        out_shape=jax.ShapeDtypeStruct((B, Qp, Dvp), queries.dtype),
        grid_spec=pltpu.PrefetchScalarGridSpec(
            num_scalar_prefetch=0,
            grid=grid,
            in_specs=[
                pl.BlockSpec((Bt, Qp, Dp), lambda i: (i, 0, 0)),
                pl.BlockSpec((Bt, Kp, Dp), lambda i: (i, 0, 0)),
                pl.BlockSpec((Bt, Kp, Dvp), lambda i: (i, 0, 0)),
                pl.BlockSpec((Bt, 1, Kp), lambda i: (i, 0, 0)),
            ],
            out_specs=pl.BlockSpec((Bt, Qp, Dvp), lambda i: (i, 0, 0)),
        ),
        compiler_params=pltpu.CompilerParams(
            dimension_semantics=("parallel",)),
        cost_estimate=cost,
    )(qp, kp, vp, key_mask)

    return out_padded[:, :Q, :Dv]


def _reference(queries, keys, values, valid_lens):
    """Pure-JAX reference mirroring the PyTorch module."""
    d = queries.shape[-1]
    scores = jnp.einsum("bqd,bkd->bqk", queries, keys) / math.sqrt(d)
    if valid_lens is not None:
        K = keys.shape[1]
        mask = jnp.arange(K)[None, None, :] < valid_lens[:, None, None]
        scores = jnp.where(mask, scores, -1000000.0)
    weights = jax.nn.softmax(scores, axis=-1)
    return jnp.einsum("bqk,bkv->bqv", weights, values)


if __name__ == "__main__":
    key = jax.random.PRNGKey(0)
    kq, kk, kv = jax.random.split(key, 3)

    B, Q, K, D, Dv = 2, 8, 8, 16, 32
    queries = jax.random.normal(kq, (B, Q, D), dtype=jnp.float32)
    keys = jax.random.normal(kk, (B, K, D), dtype=jnp.float32)
    values = jax.random.normal(kv, (B, K, Dv), dtype=jnp.float32)
    valid_lens = jnp.array([3, 6], dtype=jnp.int32)

    # Masked case.
    out = dot_product_attention(queries, keys, values, valid_lens)
    out = jax.block_until_ready(out)
    ref = _reference(queries, keys, values, valid_lens)
    assert out.shape == (B, Q, Dv)
    # Tolerance accounts for the approximate (EUP) reciprocal in the softmax norm.
    assert jnp.allclose(out, ref, atol=5e-3, rtol=5e-3), "mismatch vs reference (masked)"

    # No-mask case (valid_lens=None).
    out2 = jax.block_until_ready(dot_product_attention(queries, keys, values, None))
    ref2 = _reference(queries, keys, values, None)
    assert jnp.allclose(out2, ref2, atol=5e-3, rtol=5e-3), "mismatch vs reference (no mask)"

    print("KERNEL_OK")
</pallas_src>

<mosaic_0001>
module attributes {stable_mosaic.version = 11 : i64} {
  func.func @_attention_kernel(%arg0: i32, %arg1: memref<1x8x128xf32, #tpu.memory_space<vmem>>, %arg2: memref<1x128x128xf32, #tpu.memory_space<vmem>>, %arg3: memref<1x128x128xf32, #tpu.memory_space<vmem>>, %arg4: memref<1x1x128xi32, #tpu.memory_space<vmem>>, %arg5: memref<1x8x128xf32, #tpu.memory_space<vmem>>) attributes {dimension_semantics = [#tpu.dimension_semantics<parallel>], iteration_bounds = array<i64: 2>, scalar_prefetch = 0 : i64, scratch_operands = 0 : i64, tpu.core_type = #tpu.core_type<tc>, window_params = [{transform_indices = @transform_0, window_bounds = array<i64: 1, 8, 128>}, {transform_indices = @transform_1, window_bounds = array<i64: 1, 128, 128>}, {transform_indices = @transform_2, window_bounds = array<i64: 1, 128, 128>}, {transform_indices = @transform_3, window_bounds = array<i64: 1, 1, 128>}, {transform_indices = @transform_4, window_bounds = array<i64: 1, 8, 128>}]} {
    %c0 = arith.constant 0 : index
    %c0_0 = arith.constant 0 : index
    %c0_1 = arith.constant 0 : index
    %0 = vector.load %arg1[%c0, %c0_0, %c0_1] : memref<1x8x128xf32, #tpu.memory_space<vmem>>, vector<1x8x128xf32>
    %c0_2 = arith.constant 0 : index
    %c0_3 = arith.constant 0 : index
    %c0_4 = arith.constant 0 : index
    %1 = vector.load %arg2[%c0_2, %c0_3, %c0_4] : memref<1x128x128xf32, #tpu.memory_space<vmem>>, vector<1x128x128xf32>
    %c0_5 = arith.constant 0 : index
    %c0_6 = arith.constant 0 : index
    %c0_7 = arith.constant 0 : index
    %2 = vector.load %arg3[%c0_5, %c0_6, %c0_7] : memref<1x128x128xf32, #tpu.memory_space<vmem>>, vector<1x128x128xf32>
    "tpu.trace_start"() <{level = 10 : i32, message = "bqd,bkd->bqk"}> : () -> ()
    %cst = arith.constant dense<0.000000e+00> : vector<1x8x128xf32>
    %3 = tpu.matmul %0, %1, %cst {dimension_numbers = #tpu.dot_dimension_numbers<[2], [2], [1], [1], [0, 0, 0, 1, 1, 1], [0], [0]>} : vector<1x8x128xf32>, vector<1x128x128xf32>, vector<1x8x128xf32> -> vector<1x8x128xf32>
    "tpu.trace_stop"() : () -> ()
    %cst_8 = arith.constant 2.500000e-01 : f32
    %4 = vector.broadcast %cst_8 : f32 to vector<1x8x128xf32>
    %5 = arith.mulf %3, %4 : vector<1x8x128xf32>
    %c0_9 = arith.constant 0 : index
    %c0_10 = arith.constant 0 : index
    %c0_11 = arith.constant 0 : index
    %6 = vector.load %arg4[%c0_9, %c0_10, %c0_11] : memref<1x1x128xi32, #tpu.memory_space<vmem>>, vector<1x1x128xi32>
    %c0_i32 = arith.constant 0 : i32
    %7 = vector.broadcast %c0_i32 : i32 to vector<1x1x128xi32>
    %8 = arith.cmpi ne, %6, %7 : vector<1x1x128xi32>
    %cst_12 = arith.constant -1.000000e+06 : f32
    %9 = vector.shape_cast %8 : vector<1x1x128xi1> to vector<1x1x128xi1>
    %10 = vector.broadcast %9 : vector<1x1x128xi1> to vector<1x8x128xi1>
    %11 = vector.broadcast %cst_12 : f32 to vector<1x8x128xf32>
    %12 = arith.select %10, %5, %11 : vector<1x8x128xi1>, vector<1x8x128xf32>
    %cst_13 = arith.constant dense<0xFF800000> : vector<1x8xf32>
    %13 = vector.multi_reduction <maximumf>, %12, %cst_13 [2] : vector<1x8x128xf32> to vector<1x8xf32>
    %14 = vector.shape_cast %13 : vector<1x8xf32> to vector<1x8x1xf32>
    %15 = vector.broadcast %14 : vector<1x8x1xf32> to vector<1x8x128xf32>
    %16 = arith.subf %12, %15 : vector<1x8x128xf32>
    %17 = math.exp %16 : vector<1x8x128xf32>
    %cst_14 = arith.constant dense<0.000000e+00> : vector<1x8xf32>
    %18 = vector.multi_reduction <add>, %17, %cst_14 [2] : vector<1x8x128xf32> to vector<1x8xf32>
    %19 = vector.shape_cast %18 : vector<1x8xf32> to vector<1x8x1xf32>
    %20 = tpu.reciprocal %19 {approx = true} : vector<1x8x1xf32> -> vector<1x8x1xf32>
    %21 = vector.broadcast %20 : vector<1x8x1xf32> to vector<1x8x128xf32>
    %22 = arith.mulf %17, %21 : vector<1x8x128xf32>
    "tpu.trace_start"() <{level = 10 : i32, message = "bqk,bkv->bqv"}> : () -> ()
    %cst_15 = arith.constant dense<0.000000e+00> : vector<1x8x128xf32>
    %23 = tpu.matmul %22, %2, %cst_15 {dimension_numbers = #tpu.dot_dimension_numbers<[2], [1], [1], [2], [0, 0, 0, 1, 1, 2], [0], [0]>} : vector<1x8x128xf32>, vector<1x128x128xf32>, vector<1x8x128xf32> -> vector<1x8x128xf32>
    "tpu.trace_stop"() : () -> ()
    %c0_16 = arith.constant 0 : index
    %c0_17 = arith.constant 0 : index
    %c0_18 = arith.constant 0 : index
    %24 = vector.load %arg5[%c0_16, %c0_17, %c0_18] : memref<1x8x128xf32, #tpu.memory_space<vmem>>, vector<1x8x128xf32>
    tpu.vector_store %arg5[%c0_16, %c0_17, %c0_18], %23 {strides = array<i32>} : memref<1x8x128xf32, #tpu.memory_space<vmem>>, vector<1x8x128xf32>,
    return
  }
  func.func @transform_0(%arg0: i32) -> (i32, i32, i32) {
    %c0_i32 = arith.constant 0 : i32
    %c0_i32_0 = arith.constant 0 : i32
    %c0_i32_1 = arith.constant 0 : i32
    return %arg0, %c0_i32, %c0_i32_0 : i32, i32, i32
  }
  func.func @transform_1(%arg0: i32) -> (i32, i32, i32) {
    %c0_i32 = arith.constant 0 : i32
    %c0_i32_0 = arith.constant 0 : i32
    %c0_i32_1 = arith.constant 0 : i32
    return %arg0, %c0_i32, %c0_i32_0 : i32, i32, i32
  }
  func.func @transform_2(%arg0: i32) -> (i32, i32, i32) {
    %c0_i32 = arith.constant 0 : i32
    %c0_i32_0 = arith.constant 0 : i32
    %c0_i32_1 = arith.constant 0 : i32
    return %arg0, %c0_i32, %c0_i32_0 : i32, i32, i32
  }
  func.func @transform_3(%arg0: i32) -> (i32, i32, i32) {
    %c0_i32 = arith.constant 0 : i32
    %c0_i32_0 = arith.constant 0 : i32
    %c0_i32_1 = arith.constant 0 : i32
    return %arg0, %c0_i32, %c0_i32_0 : i32, i32, i32
  }
  func.func @transform_4(%arg0: i32) -> (i32, i32, i32) {
    %c0_i32 = arith.constant 0 : i32
    %c0_i32_0 = arith.constant 0 : i32
    %c0_i32_1 = arith.constant 0 : i32
    return %arg0, %c0_i32, %c0_i32_0 : i32, i32, i32
  }
}

</mosaic_0001>

<llo_original>
// kernel: tpu_custom_call.1
$region0: #{tpu_custom_call.1}
  #allocation0 [shape = 'u32[]', space=smem, size = 0x4, offset = 0x4, fixed_abs, tag = 'smem constant byte address 0x4 - core index']
  #allocation1 [shape = 'u32[144,128]{1,0:T(1,128)}', space=vmem, size = 0x12000, scoped, tag = 'internal scratch']
  %s0 = inlined_call_operand.hbm [shape: f32[2,8,128], index: 0, kind: input, shape index: {}]
  %s1 = inlined_call_operand.hbm [shape: f32[2,128,128], index: 1, kind: input, shape index: {}]
  %s2 = inlined_call_operand.hbm [shape: f32[2,128,128], index: 2, kind: input, shape index: {}]
  %s3 = inlined_call_operand.vmem [shape: s32[2,1,128], index: 3, kind: input, shape index: {}]
  %s4 = inlined_call_operand.hbm [shape: f32[2,8,128], index: 4, kind: output, shape index: {}]
  %s5 = sld [smem:[#allocation0]]
  $region61: #{tpu_custom_call.1} parent=0
    _
  %s7 = ssub.s32 1, %s5
  %s8 = scalar_select 0, %s7, %s5
  $region1: #{tpu_custom_call.1} parent=0
    #allocation2 [shape = 'u8[8192]{0}', space=vmem, size = 0x2000, scoped, tag = 'input window, operand 0']
    #allocation3 [shape = 's32[2]{0}', space=sflag, size = 0x8, scoped, tag = 'scoped memory for tpu_custom_call.1']
    #allocation4 [shape = 's32[2]{0}', space=sflag, size = 0x8, scoped, tag = 'scoped memory for tpu_custom_call.1']
    #allocation5 [shape = 'u8[131072]{0}', space=vmem, size = 0x20000, scoped, tag = 'input window, operand 1']
    #allocation6 [shape = 's32[2]{0}', space=sflag, size = 0x8, scoped, tag = 'scoped memory for tpu_custom_call.1']
    #allocation7 [shape = 'u8[131072]{0}', space=vmem, size = 0x20000, scoped, tag = 'input window, operand 2']
    #allocation8 [shape = 'u8[8192]{0}', space=vmem, size = 0x2000, scoped, tag = 'output window, operand 0']
    %9 = vsyncpa [#allocation3], 0
    %s10 = scalar_lea.sflag [#allocation3], 1
    %11 = vsyncpa %s10, 0
    %12 = vsyncpa [#allocation6], 0
    %s13 = scalar_lea.sflag [#allocation6], 1
    %14 = vsyncpa %s13, 0
    %15 = vsyncpa [#allocation4], 0
    %s16 = scalar_lea.sflag [#allocation4], 1
    %17 = vsyncpa %s16, 0
    loop: start=0, step=1, limit=4
    $region2: #{tpu_custom_call.1} parent=1 // loop_pre_header
      _
    $region3: #{tpu_custom_call.1} parent=1 // loop_header
      %s19 = sphi 0, %s23
      %p20 = scmp.ge.s32.totalorder %s19, 4
      %s29 = sphi 0, %s31
      %s32 = sphi 0, %s29
      %s33 = sphi 0, %s32
      %s49 = sphi 0, %s33
      %s55 = sphi 0, %s57
      %s58 = sphi 0, %s55
      %s59 = sphi 0, %s58
      %s75 = sphi 0, %s59
      %s81 = sphi 0, %s83
      %s84 = sphi 0, %s81
      %s85 = sphi 0, %s84
      %s101 = sphi 0, %s85
      %s107 = sphi 0, %s109
      %s110 = sphi 0, %s107
      %s111 = sphi 0, %s110
      %s127 = sphi 0, %s111
      %s133 = sphi 0, %s135
      %s136 = sphi 0, %s133
      %s137 = sphi 0, %s136
      %s153 = sphi 0, %s137
    $region4: #{tpu_custom_call.1} parent=1 // loop_header_branch
      %22 = sbr.rel (%p20) target = $region8
    $region5: #{tpu_custom_call.1} parent=1 // loop_body
      %s24 = ssub.s32 %s19, 1
      %s25 = ssub.s32 %s19, 2
      %s26 = sadd.s32 %s19, 1
      %s27 = ssub.s32 %s19, %s26
      %p28 = scmp.eq.s32.totalorder %s27, 0
      %s30 = sadd.s32 %s29, 1
      %s31 = scalar_select %p28, %s29, %s30
      %p34 = pneg %p28
      %p35 = scmp.eq.s32.totalorder %s19, 1
      %p36 = por %p34, %p35
      %p37 = scmp.ne.s32.totalorder %s29, %s32
      %p38 = scmp.eq.s32.totalorder %s19, 0
      %p39 = por %p37, %p38
      %p40 = scmp.ne.s32.totalorder %s29, %s32
      %p41 = scmp.eq.s32.totalorder %s24, 1
      %p42 = por %p40, %p41
      %p43 = scmp.ne.s32.totalorder %s32, %s33
      %p44 = scmp.eq.s32.totalorder %s24, 0
      %p45 = por %p43, %p44
      %p46 = scmp.ne.s32.totalorder %s32, %s33
      %p47 = scmp.eq.s32.totalorder %s25, 1
      %p48 = por %p46, %p47
      %p50 = scmp.ne.s32.totalorder %s33, %s49
      %p51 = scmp.eq.s32.totalorder %s25, 0
      %p52 = por %p50, %p51
      %s53 = ssub.s32 %s19, %s26
      %p54 = scmp.eq.s32.totalorder %s53, 0
      %s56 = sadd.s32 %s55, 1
      %s57 = scalar_select %p54, %s55, %s56
      %p60 = pneg %p54
      %p61 = scmp.eq.s32.totalorder %s19, 1
      %p62 = por %p60, %p61
      %p63 = scmp.ne.s32.totalorder %s55, %s58
      %p64 = scmp.eq.s32.totalorder %s19, 0
      %p65 = por %p63, %p64
      %p66 = scmp.ne.s32.totalorder %s55, %s58
      %p67 = scmp.eq.s32.totalorder %s24, 1
      %p68 = por %p66, %p67
      %p69 = scmp.ne.s32.totalorder %s58, %s59
      %p70 = scmp.eq.s32.totalorder %s24, 0
      %p71 = por %p69, %p70
      %p72 = scmp.ne.s32.totalorder %s58, %s59
      %p73 = scmp.eq.s32.totalorder %s25, 1
      %p74 = por %p72, %p73
      %p76 = scmp.ne.s32.totalorder %s59, %s75
      %p77 = scmp.eq.s32.totalorder %s25, 0
      %p78 = por %p76, %p77
      %s79 = ssub.s32 %s19, %s26
      %p80 = scmp.eq.s32.totalorder %s79, 0
      %s82 = sadd.s32 %s81, 1
      %s83 = scalar_select %p80, %s81, %s82
      %p86 = pneg %p80
      %p87 = scmp.eq.s32.totalorder %s19, 1
      %p88 = por %p86, %p87
      %p89 = scmp.ne.s32.totalorder %s81, %s84
      %p90 = scmp.eq.s32.totalorder %s19, 0
      %p91 = por %p89, %p90
      %p92 = scmp.ne.s32.totalorder %s81, %s84
      %p93 = scmp.eq.s32.totalorder %s24, 1
      %p94 = por %p92, %p93
      %p95 = scmp.ne.s32.totalorder %s84, %s85
      %p96 = scmp.eq.s32.totalorder %s24, 0
      %p97 = por %p95, %p96
      %p98 = scmp.ne.s32.totalorder %s84, %s85
      %p99 = scmp.eq.s32.totalorder %s25, 1
      %p100 = por %p98, %p99
      %p102 = scmp.ne.s32.totalorder %s85, %s101
      %p103 = scmp.eq.s32.totalorder %s25, 0
      %p104 = por %p102, %p103
      %s105 = ssub.s32 %s19, %s26
      %p106 = scmp.eq.s32.totalorder %s105, 0
      %s108 = sadd.s32 %s107, 1
      %s109 = scalar_select %p106, %s107, %s108
      %p112 = pneg %p106
      %p113 = scmp.eq.s32.totalorder %s19, 1
      %p114 = por %p112, %p113
      %p115 = scmp.ne.s32.totalorder %s107, %s110
      %p116 = scmp.eq.s32.totalorder %s19, 0
      %p117 = por %p115, %p116
      %p118 = scmp.ne.s32.totalorder %s107, %s110
      %p119 = scmp.eq.s32.totalorder %s24, 1
      %p120 = por %p118, %p119
      %p121 = scmp.ne.s32.totalorder %s110, %s111
      %p122 = scmp.eq.s32.totalorder %s24, 0
      %p123 = por %p121, %p122
      %p124 = scmp.ne.s32.totalorder %s110, %s111
      %p125 = scmp.eq.s32.totalorder %s25, 1
      %p126 = por %p124, %p125
      %p128 = scmp.ne.s32.totalorder %s111, %s127
      %p129 = scmp.eq.s32.totalorder %s25, 0
      %p130 = por %p128, %p129
      %s131 = ssub.s32 %s19, %s26
      %p132 = scmp.eq.s32.totalorder %s131, 0
      %s134 = sadd.s32 %s133, 1
      %s135 = scalar_select %p132, %s133, %s134
      %p138 = pneg %p132
      %p139 = scmp.eq.s32.totalorder %s19, 1
      %p140 = por %p138, %p139
      %p141 = scmp.ne.s32.totalorder %s133, %s136
      %p142 = scmp.eq.s32.totalorder %s19, 0
      %p143 = por %p141, %p142
      %p144 = scmp.ne.s32.totalorder %s133, %s136
      %p145 = scmp.eq.s32.totalorder %s24, 1
      %p146 = por %p144, %p145
      %p147 = scmp.ne.s32.totalorder %s136, %s137
      %p148 = scmp.eq.s32.totalorder %s24, 0
      %p149 = por %p147, %p148
      %p150 = scmp.ne.s32.totalorder %s136, %s137
      %p151 = scmp.eq.s32.totalorder %s25, 1
      %p152 = por %p150, %p151
      %p154 = scmp.ne.s32.totalorder %s137, %s153
      %p155 = scmp.eq.s32.totalorder %s25, 0
      %p156 = por %p154, %p155
      %p157 = scmp.le.s32.totalorder 1, %s19
      %p158 = scmp.lt.s32.totalorder %s19, 3
      %p159 = pnand %p157, %p158
      %p160 = pneg %p159
      // Predicated region
      $region9: #{tpu_custom_call.1} parent=5 // pred_check
        _
      $region10: #{tpu_custom_call.1} parent=5 // pred_check_branch
        %162 = sbr.rel (%p159) target = $region12
      $region11: #{tpu_custom_call.1} parent=5 // pred_region
        %s163 = ssub.s32 %s19, 1
      $region12: #{tpu_custom_call.1} parent=5 // pred_fallthru
        _
      %p164 = scmp.lt.s32.totalorder %s19, 2
      // Predicated region
      $region13: #{tpu_custom_call.1} parent=5 // pred_check
        %p165 = pneg %p164
      $region14: #{tpu_custom_call.1} parent=5 // pred_check_branch
        %167 = sbr.rel (%p165) target = $region16
      $region15: #{tpu_custom_call.1} parent=5 // pred_region
        // Predicated region
        $region17: #{tpu_custom_call.1} parent=15 // pred_check
          %p168 = pneg %p39
        $region18: #{tpu_custom_call.1} parent=15 // pred_check_branch
          %170 = sbr.rel (%p168) target = $region20
        $region19: #{tpu_custom_call.1} parent=15 // pred_region
          %s171 = sand.u32 %s29, 1
          %s172 = scalar_lea.sflag [#allocation3], %s171
          %s173 = sand.u32 %s29, 1
          %s174 = smul.addr %s173, 8
          %s175 = scalar_lea.vmem [#allocation2], %s174
          %s177 = ssub.s32 128, 128
          %178 = vsyncadd %s172, %s177
          %s179 = smul.addr %s19, 128
          %s180 = scalar_lea.hbm %s0, %s179
          %s182 = sshll.u32 %s175, 4
          %s183 = int_to_ptr.vmem [resolvable:$true] %s182
          %185 = dma.hbm_to_vmem [thread:$0]  %s180, 128, %s183, %s172
        $region20: #{tpu_custom_call.1} parent=15 // pred_fallthru
          _
        // Predicated region
        $region21: #{tpu_custom_call.1} parent=15 // pred_check
          %p186 = pneg %p65
        $region22: #{tpu_custom_call.1} parent=15 // pred_check_branch
          %188 = sbr.rel (%p186) target = $region24
        $region23: #{tpu_custom_call.1} parent=15 // pred_region
          %s189 = sand.u32 %s19, 1
          %s190 = scalar_lea.sflag [#allocation6], %s189
          %s191 = sand.u32 %s55, 1
          %s192 = smul.addr %s191, 128
          %s193 = scalar_lea.vmem [#allocation5], %s192
          %s195 = ssub.s32 2048, 2048
          %196 = vsyncadd %s190, %s195
          %s197 = smul.addr %s19, 16
          %s198 = smul.addr %s197, 128
          %s199 = scalar_lea.hbm %s1, %s198
          %s200 = sshll.u32 %s193, 4
          %s201 = int_to_ptr.vmem [resolvable:$true] %s200
          %206 = dma.hbm_to_vmem [thread:$0]  %s199, 2048, %s201, %s190, 128, 128, 8
        $region24: #{tpu_custom_call.1} parent=15 // pred_fallthru
          _
        // Predicated region
        $region25: #{tpu_custom_call.1} parent=15 // pred_check
          %p207 = pneg %p91
        $region26: #{tpu_custom_call.1} parent=15 // pred_check_branch
          %209 = sbr.rel (%p207) target = $region28
        $region27: #{tpu_custom_call.1} parent=15 // pred_region
          %s210 = sand.u32 %s19, 1
          %s211 = scalar_lea.sflag [#allocation6], %s210
          %s212 = sand.u32 %s81, 1
          %s213 = smul.addr %s212, 128
          %s214 = scalar_lea.vmem [#allocation7], %s213
          %s216 = ssub.s32 2048, 2048
          %217 = vsyncadd %s211, %s216
          %s218 = smul.addr %s19, 16
          %s219 = smul.addr %s218, 128
          %s220 = scalar_lea.hbm %s2, %s219
          %s221 = sshll.u32 %s214, 4
          %s222 = int_to_ptr.vmem [resolvable:$true] %s221
          %227 = dma.hbm_to_vmem [thread:$0]  %s220, 2048, %s222, %s211, 128, 128, 8
        $region28: #{tpu_custom_call.1} parent=15 // pred_fallthru
          _
        // Predicated region
        $region29: #{tpu_custom_call.1} parent=15 // pred_check
          %p228 = pneg %p117
        $region30: #{tpu_custom_call.1} parent=15 // pred_check_branch
          %230 = sbr.rel (%p228) target = $region32
        $region31: #{tpu_custom_call.1} parent=15 // pred_region
          %p231 = scmp.lt.s32.totalorder %s19, 1
          %s232 = scalar_select %p231, %s19, 1
          %s233 = scalar_lea.vmem %s3, %s232
        $region32: #{tpu_custom_call.1} parent=15 // pred_fallthru
          _
      $region16: #{tpu_custom_call.1} parent=5 // pred_fallthru
        _
      %p234 = scmp.le.s32.totalorder 1, %s19
      %p235 = scmp.lt.s32.totalorder %s19, 3
      %p236 = pnand %p234, %p235
      %p237 = pneg %p236
      // Predicated region
      $region33: #{tpu_custom_call.1} parent=5 // pred_check
        _
      $region34: #{tpu_custom_call.1} parent=5 // pred_check_branch
        %239 = sbr.rel (%p236) target = $region36
      $region35: #{tpu_custom_call.1} parent=5 // pred_region
        %s240 = ssub.s32 %s19, 1
        %s241 = sand.u32 %s32, 1
        %s242 = scalar_lea.sflag [#allocation3], %s241
        %s243 = sand.u32 %s32, 1
        %s244 = smul.addr %s243, 8
        %s245 = scalar_lea.vmem [#allocation2], %s244
        // Predicated region
        $region37: #{tpu_custom_call.1} parent=35 // pred_check
          %p246 = pneg %p45
        $region38: #{tpu_custom_call.1} parent=35 // pred_check_branch
          %248 = sbr.rel (%p246) target = $region40
        $region39: #{tpu_custom_call.1} parent=35 // pred_region
          %249 = dma.done %s242, 128
        $region40: #{tpu_custom_call.1} parent=35 // pred_fallthru
          _
        %s250 = sand.u32 %s24, 1
        %s251 = scalar_lea.sflag [#allocation6], %s250
        %s252 = sand.u32 %s58, 1
        %s253 = smul.addr %s252, 128
        %s254 = scalar_lea.vmem [#allocation5], %s253
        // Predicated region
        $region41: #{tpu_custom_call.1} parent=35 // pred_check
          %p255 = pneg %p71
        $region42: #{tpu_custom_call.1} parent=35 // pred_check_branch
          %257 = sbr.rel (%p255) target = $region44
        $region43: #{tpu_custom_call.1} parent=35 // pred_region
          %258 = dma.done %s251, 2048
        $region44: #{tpu_custom_call.1} parent=35 // pred_fallthru
          _
        %s259 = sand.u32 %s24, 1
        %s260 = scalar_lea.sflag [#allocation6], %s259
        %s261 = sand.u32 %s84, 1
        %s262 = smul.addr %s261, 128
        %s263 = scalar_lea.vmem [#allocation7], %s262
        // Predicated region
        $region45: #{tpu_custom_call.1} parent=35 // pred_check
          %p264 = pneg %p97
        $region46: #{tpu_custom_call.1} parent=35 // pred_check_branch
          %266 = sbr.rel (%p264) target = $region48
        $region47: #{tpu_custom_call.1} parent=35 // pred_region
          %267 = dma.done %s260, 2048
        $region48: #{tpu_custom_call.1} parent=35 // pred_fallthru
          _
        %s268 = sand.u32 %s32, 1
        %s269 = scalar_lea.sflag [#allocation3], %s268
        %s270 = sand.u32 %s32, 1
        %s271 = smul.addr %s270, 8
        %s272 = scalar_lea.vmem [#allocation2], %s271
        %p273 = pneg %p45
        %p274 = pneg %p42
        %s275 = sand.u32 %s24, 1
        %s276 = scalar_lea.sflag [#allocation6], %s275
        %s277 = sand.u32 %s58, 1
        %s278 = smul.addr %s277, 128
        %s279 = scalar_lea.vmem [#allocation5], %s278
        %p280 = pneg %p71
        %p281 = pneg %p68
        %s282 = sand.u32 %s24, 1
        %s283 = scalar_lea.sflag [#allocation6], %s282
        %s284 = sand.u32 %s84, 1
        %s285 = smul.addr %s284, 128
        %s286 = scalar_lea.vmem [#allocation7], %s285
        %p287 = pneg %p97
        %p288 = pneg %p94
        %p289 = scmp.lt.s32.totalorder %s24, 1
        %s290 = scalar_select %p289, %s24, 1
        %s291 = scalar_lea.vmem %s3, %s290
        %p292 = pneg %p123
        %p293 = pneg %p120
        %p294 = pneg %p149
        %p295 = pneg %p146
        %s296 = sand.u32 %s136, 1
        %s297 = scalar_lea.sflag [#allocation4], %s296
        %s298 = sand.u32 %s136, 1
        %s299 = smul.addr %s298, 8
        %s300 = scalar_lea.vmem [#allocation8], %s299
        %p301 = scmp.lt.s32.totalorder %s24, 1
        %s302 = scalar_select %p301, %s24, 1
        %s303 = scalar_lea.vmem %s3, %s302
        %v304 = vld [vmem:[%s245] sm:$0xff]
        %v305 = vld [vmem:[%s254] sm:$0xff]
        %v306 = vld [vmem:[%s254 + $0x8] sm:$0xff]
        %v307 = vld [vmem:[%s254 + $0x10] sm:$0xff]
        %v308 = vld [vmem:[%s254 + $0x18] sm:$0xff]
        %v309 = vld [vmem:[%s254 + $0x20] sm:$0xff]
        %v310 = vld [vmem:[%s254 + $0x28] sm:$0xff]
        %v311 = vld [vmem:[%s254 + $0x30] sm:$0xff]
        %v312 = vld [vmem:[%s254 + $0x38] sm:$0xff]
        %v313 = vld [vmem:[%s254 + $0x40] sm:$0xff]
        %v314 = vld [vmem:[%s254 + $0x48] sm:$0xff]
        %v315 = vld [vmem:[%s254 + $0x50] sm:$0xff]
        %v316 = vld [vmem:[%s254 + $0x58] sm:$0xff]
        %v317 = vld [vmem:[%s254 + $0x60] sm:$0xff]
        %v318 = vld [vmem:[%s254 + $0x68] sm:$0xff]
        %v319 = vld [vmem:[%s254 + $0x70] sm:$0xff]
        %v320 = vld [vmem:[%s254 + $0x78] sm:$0xff]
        %v321 = vld [vmem:[%s263] sm:$0xff]
        %v322 = vld [vmem:[%s263 + $0x8] sm:$0xff]
        %v323 = vld [vmem:[%s263 + $0x10] sm:$0xff]
        %v324 = vld [vmem:[%s263 + $0x18] sm:$0xff]
        %v325 = vld [vmem:[%s263 + $0x20] sm:$0xff]
        %v326 = vld [vmem:[%s263 + $0x28] sm:$0xff]
        %v327 = vld [vmem:[%s263 + $0x30] sm:$0xff]
        %v328 = vld [vmem:[%s263 + $0x38] sm:$0xff]
        %v329 = vld [vmem:[%s263 + $0x40] sm:$0xff]
        %v330 = vld [vmem:[%s263 + $0x48] sm:$0xff]
        %v331 = vld [vmem:[%s263 + $0x50] sm:$0xff]
        %v332 = vld [vmem:[%s263 + $0x58] sm:$0xff]
        %v333 = vld [vmem:[%s263 + $0x60] sm:$0xff]
        %v334 = vld [vmem:[%s263 + $0x68] sm:$0xff]
        %v335 = vld [vmem:[%s263 + $0x70] sm:$0xff]
        %v336 = vld [vmem:[%s263 + $0x78] sm:$0xff]
        %337 = vmatprep.subr.mxu0 0.0
        %338 = vmatpush1.xpose.msra.mxu0 %v305
        %339 = vmatprep.subr.mxu0 0.0
        %340 = vmatpush1.xpose.msra.mxu0 %v306
        %341 = vmatprep.subr.mxu0 0.0
        %342 = vmatpush1.xpose.msra.mxu0 %v307
        %343 = vmatprep.subr.mxu0 0.0
        %344 = vmatpush1.xpose.msra.mxu0 %v308
        %345 = vmatprep.subr.mxu0 0.0
        %346 = vmatpush1.xpose.msra.mxu0 %v309
        %347 = vmatprep.subr.mxu0 0.0
        %348 = vmatpush1.xpose.msra.mxu0 %v310
        %349 = vmatprep.subr.mxu0 0.0
        %350 = vmatpush1.xpose.msra.mxu0 %v311
        %351 = vmatprep.subr.mxu0 0.0
        %352 = vmatpush1.xpose.msra.mxu0 %v312
        %353 = vmatprep.subr.mxu0 0.0
        %354 = vmatpush1.xpose.msra.mxu0 %v313
        %355 = vmatprep.subr.mxu0 0.0
        %356 = vmatpush1.xpose.msra.mxu0 %v314
        %357 = vmatprep.subr.mxu0 0.0
        %358 = vmatpush1.xpose.msra.mxu0 %v315
        %359 = vmatprep.subr.mxu0 0.0
        %360 = vmatpush1.xpose.msra.mxu0 %v316
        %361 = vmatprep.subr.mxu0 0.0
        %362 = vmatpush1.xpose.msra.mxu0 %v317
        %363 = vmatprep.subr.mxu0 0.0
        %364 = vmatpush1.xpose.msra.mxu0 %v318
        %365 = vmatprep.subr.mxu0 0.0
        %366 = vmatpush1.xpose.msra.mxu0 %v319
        %367 = vmatprep.subr.mxu0 0.0
        %368 = vmatpush1.xpose.msra.mxu0 %v320
        %369 = vmatprep.subr.mxu0 0.0
        %370 = vmatpush1.xpose.msra.mxu0 0.0
        %371 = vmatprep.subr.mxu0 0.0
        %372 = vmatpush1.xpose.msra.mxu0 0.0
        %373 = vmatprep.subr.mxu0 0.0
        %374 = vmatpush1.xpose.msra.mxu0 0.0
        %375 = vmatprep.subr.mxu0 0.0
        %376 = vmatpush1.xpose.msra.mxu0 0.0
        %377 = vmatprep.subr.mxu0 0.0
        %378 = vmatpush1.xpose.msra.mxu0 0.0
        %379 = vmatprep.subr.mxu0 0.0
        %380 = vmatpush1.xpose.msra.mxu0 0.0
        %381 = vmatprep.subr.mxu0 0.0
        %382 = vmatpush1.xpose.msra.mxu0 0.0
        %383 = vmatprep.subr.mxu0 0.0
        %384 = vmatpush1.xpose.msra.mxu0 0.0
        %385 = vmatprep.subr.mxu0 0.0
        %386 = vmatpush1.xpose.msra.mxu0 0.0
        %387 = vmatprep.subr.mxu0 0.0
        %388 = vmatpush1.xpose.msra.mxu0 0.0
        %389 = vmatprep.subr.mxu0 0.0
        %390 = vmatpush1.xpose.msra.mxu0 0.0
        %391 = vmatprep.subr.mxu0 0.0
        %392 = vmatpush1.xpose.msra.mxu0 0.0
        %393 = vmatprep.subr.mxu0 0.0
        %394 = vmatpush1.xpose.msra.mxu0 0.0
        %395 = vmatprep.subr.mxu0 0.0
        %396 = vmatpush1.xpose.msra.mxu0 0.0
        %397 = vmatprep.subr.mxu0 0.0
        %398 = vmatpush1.xpose.msra.mxu0 0.0
        %399 = vmatprep.subr.mxu0 0.0
        %400 = vmatpush1.xpose.msra.mxu0 0.0
        %401 = vmatprep.mubr.f32.mxu0 0.0
        %402 = vmatmul.mubr.f32.gmra.mrb[0].mxu0 %v304
        %v403 = vpop.f32.mrb[0].mxu0
        %v404 = vadd.f32 0.0, %v403
        %v405 = vpop.f32.mrb[0].mxu0
        %406 = vdwg.mxu0
        %v407 = vmul.f32 %v404, 0.25
        %v408 = vld [vmem:[%s303] sm:$0x1]
        %vm409 = vcmp.ne.s32.totalorder %v408, 0
        %v410 = vsel %vm409, 1, 0
        %v411 = vlaneseq
        %v412 = vshrl.u32 %v411, 7
        %v413 = vsub.s32 0, %v412
        %v414 = vrot.slane %v410, %v413
        %vm415 = vcmp.eq.s32.totalorder %v414, 1
        %v416 = vsel %vm415, %v407, -1000000.0
        %417 = vmax.xlane.f32.xlu0 %v416
        %v418 = vpop.xlane.xlu0 %417
        %v419 = vsub.f32 %v416, %v418
        %v420 = vmul.f32 %v419, 1.442695
        %v421 = vpow.pop %v420
        %422 = vadd.xlane.f32.xlu0 %v421
        %v423 = vpop.xlane.xlu0 %422
        %v424 = vrcp.pop %v423
        %v425 = vmul.f32 %v421, %v424
        %426 = vmatprep.subr.mxu0 0.0
        %427 = vmatpush1.msra.mxu0 %v321
        %428 = vmatprep.subr.mxu0 0.0
        %429 = vmatpush1.msra.mxu0 %v322
        %430 = vmatprep.subr.mxu0 0.0
        %431 = vmatpush1.msra.mxu0 %v323
        %432 = vmatprep.subr.mxu0 0.0
        %433 = vmatpush1.msra.mxu0 %v324
        %434 = vmatprep.subr.mxu0 0.0
        %435 = vmatpush1.msra.mxu0 %v325
        %436 = vmatprep.subr.mxu0 0.0
        %437 = vmatpush1.msra.mxu0 %v326
        %438 = vmatprep.subr.mxu0 0.0
        %439 = vmatpush1.msra.mxu0 %v327
        %440 = vmatprep.subr.mxu0 0.0
        %441 = vmatpush1.msra.mxu0 %v328
        %442 = vmatprep.subr.mxu0 0.0
        %443 = vmatpush1.msra.mxu0 %v329
        %444 = vmatprep.subr.mxu0 0.0
        %445 = vmatpush1.msra.mxu0 %v330
        %446 = vmatprep.subr.mxu0 0.0
        %447 = vmatpush1.msra.mxu0 %v331
        %448 = vmatprep.subr.mxu0 0.0
        %449 = vmatpush1.msra.mxu0 %v332
        %450 = vmatprep.subr.mxu0 0.0
        %451 = vmatpush1.msra.mxu0 %v333
        %452 = vmatprep.subr.mxu0 0.0
        %453 = vmatpush1.msra.mxu0 %v334
        %454 = vmatprep.subr.mxu0 0.0
        %455 = vmatpush1.msra.mxu0 %v335
        %456 = vmatprep.subr.mxu0 0.0
        %457 = vmatpush1.msra.mxu0 %v336
        %458 = vmatprep.subr.mxu0 0.0
        %459 = vmatpush1.msra.mxu0 0.0
        %460 = vmatprep.subr.mxu0 0.0
        %461 = vmatpush1.msra.mxu0 0.0
        %462 = vmatprep.subr.mxu0 0.0
        %463 = vmatpush1.msra.mxu0 0.0
        %464 = vmatprep.subr.mxu0 0.0
        %465 = vmatpush1.msra.mxu0 0.0
        %466 = vmatprep.subr.mxu0 0.0
        %467 = vmatpush1.msra.mxu0 0.0
        %468 = vmatprep.subr.mxu0 0.0
        %469 = vmatpush1.msra.mxu0 0.0
        %470 = vmatprep.subr.mxu0 0.0
        %471 = vmatpush1.msra.mxu0 0.0
        %472 = vmatprep.subr.mxu0 0.0
        %473 = vmatpush1.msra.mxu0 0.0
        %474 = vmatprep.subr.mxu0 0.0
        %475 = vmatpush1.msra.mxu0 0.0
        %476 = vmatprep.subr.mxu0 0.0
        %477 = vmatpush1.msra.mxu0 0.0
        %478 = vmatprep.subr.mxu0 0.0
        %479 = vmatpush1.msra.mxu0 0.0
        %480 = vmatprep.subr.mxu0 0.0
        %481 = vmatpush1.msra.mxu0 0.0
        %482 = vmatprep.subr.mxu0 0.0
        %483 = vmatpush1.msra.mxu0 0.0
        %484 = vmatprep.subr.mxu0 0.0
        %485 = vmatpush1.msra.mxu0 0.0
        %486 = vmatprep.subr.mxu0 0.0
        %487 = vmatpush1.msra.mxu0 0.0
        %488 = vmatprep.subr.mxu0 0.0
        %489 = vmatpush1.msra.mxu0 0.0
        %490 = vmatprep.mubr.f32.mxu0 0.0
        %491 = vmatmul.mubr.f32.gmra.mrb[0].mxu0 %v425
        %v492 = vpop.f32.mrb[0].mxu0
        %v493 = vadd.f32 0.0, %v492
        %v494 = vpop.f32.mrb[0].mxu0
        %495 = vdwg.mxu0
        %496 = vst [vmem:[%s300] sm:$0xff] %v493
        %s497 = sand.u32 %s136, 1
        %s498 = scalar_lea.sflag [#allocation4], %s497
        %s499 = sand.u32 %s136, 1
        %s500 = smul.addr %s499, 8
        %s501 = scalar_lea.vmem [#allocation8], %s500
        // Predicated region
        $region49: #{tpu_custom_call.1} parent=35 // pred_check
          %p502 = pneg %p146
        $region50: #{tpu_custom_call.1} parent=35 // pred_check_branch
          %504 = sbr.rel (%p502) target = $region52
        $region51: #{tpu_custom_call.1} parent=35 // pred_region
          %s506 = ssub.s32 128, 128
          %507 = vsyncadd %s498, %s506
          %s508 = smul.addr %s24, 128
          %s509 = scalar_lea.hbm %s4, %s508
          %s511 = sshll.u32 %s501, 4
          %s512 = int_to_ptr.vmem [resolvable:$true] %s511
          %514 = dma.vmem_to_hbm [thread:$0]  %s512, 128, %s509, %s498
        $region52: #{tpu_custom_call.1} parent=35 // pred_fallthru
          _
      $region36: #{tpu_custom_call.1} parent=5 // pred_fallthru
        _
      %p515 = scmp.le.s32.totalorder 2, %s19
      // Predicated region
      $region53: #{tpu_custom_call.1} parent=5 // pred_check
        %p516 = pneg %p515
      $region54: #{tpu_custom_call.1} parent=5 // pred_check_branch
        %518 = sbr.rel (%p516) target = $region56
      $region55: #{tpu_custom_call.1} parent=5 // pred_region
        %s519 = ssub.s32 %s19, 2
        // Predicated region
        $region57: #{tpu_custom_call.1} parent=55 // pred_check
          %p520 = pneg %p152
        $region58: #{tpu_custom_call.1} parent=55 // pred_check_branch
          %522 = sbr.rel (%p520) target = $region60
        $region59: #{tpu_custom_call.1} parent=55 // pred_region
          %s523 = sand.u32 %s137, 1
          %s524 = scalar_lea.sflag [#allocation4], %s523
          %s525 = sand.u32 %s137, 1
          %s526 = smul.addr %s525, 8
          %s527 = scalar_lea.vmem [#allocation8], %s526
          %528 = dma.done %s524, 128
        $region60: #{tpu_custom_call.1} parent=55 // pred_fallthru
          _
      $region56: #{tpu_custom_call.1} parent=5 // pred_fallthru
        _
    $region6: #{tpu_custom_call.1} parent=1 // loop_footer
      %s23 = sadd.s32 1, %s19
    $region7: #{tpu_custom_call.1} parent=1 // loop_footer_branch
      %18 = sbr.rel target = $region3
    $region8: #{tpu_custom_call.1} parent=1 // loop_exit
      _
    %529 = vsyncpa [#allocation3], 1
    %s530 = scalar_lea.sflag [#allocation3], 1
    %531 = vsyncpa %s530, 1
    %532 = vsyncpa [#allocation6], 1
    %s533 = scalar_lea.sflag [#allocation6], 1
    %534 = vsyncpa %s533, 1
    %535 = vsyncpa [#allocation4], 1
    %s536 = scalar_lea.sflag [#allocation4], 1
    %537 = vsyncpa %s536, 1

</llo_original>
